<compile_context>
chip_gen: v7x
topology: tpu7x:2x2x1
jax: 0.10.0
libtpu: 0.0.40
codegen_flags: <defaults>
</compile_context>

<pallas_src>
import functools

import jax
import jax.numpy as jnp
from jax.experimental import pallas as pl
from jax.experimental.pallas import tpu as pltpu


def _layernorm_kernel(x_ref, gamma_ref, beta_ref, o_ref, *, eps, d_true):
    # x_ref: (tile_rows, d_pad); gamma/beta: (1, d_pad), already f32.
    x = x_ref[...].astype(jnp.float32)
    d_pad = x_ref.shape[-1]
    inv_d = jnp.float32(1.0 / d_true)

    # Pad lanes (if any) are zero in x, so the plain sum is exact for the mean.
    mean = jnp.sum(x, axis=-1, keepdims=True) * inv_d
    centered = x - mean
    if d_true != d_pad:
        # Masked variance: pad lanes would otherwise contribute (-mean)^2.
        lane = jax.lax.broadcasted_iota(jnp.int32, x.shape, dimension=x.ndim - 1)
        centered = jnp.where(lane < d_true, centered, 0.0)
    var = jnp.sum(centered * centered, axis=-1, keepdims=True) * inv_d
    inv = jax.lax.rsqrt(var + eps)  # EUP slot (free-ish)
    # Fused affine: normalize, scale, shift in one streaming pass.
    o_ref[...] = (centered * inv * gamma_ref[...] + beta_ref[...]).astype(o_ref.dtype)


def _vmem_capacity_bytes():
    try:
        return int(pltpu.get_tpu_info().vmem_capacity_bytes)
    except Exception:
        # Conservative fallback (v7x per-TensorCore VMEM).
        return 64 * 1024 * 1024


def _choose_tile_rows(rows, d_pad, in_bytes, out_bytes, vmem_cap):
    """Byte-targeted row-tile selection.

    Target ~6 MiB input blocks on v5e/v6e (128 MiB VMEM, 1 TC) and ~3 MiB on
    v7x (64 MiB VMEM, 2 TCs), clamped to a dtype-aware VMEM budget, with a
    minimum step count of 2 (single-TC) or 4 (v7x, prefer even) so there is
    always DMA/compute overlap and both v7x cores get work.
    """
    if rows <= 8:
        return rows

    is_v7x = vmem_cap <= (64 << 20)  # 64 MiB VMEM per TC => v7x, 2 TensorCores
    target_block_bytes = (3 << 20) if is_v7x else (6 << 20)

    # f32 temps in the kernel (x upcast, centered, pre-cast result stream);
    # count extra headroom when the input is narrower than f32.
    temp_bytes = 12 if in_bytes < 4 else 8
    per_row_vmem = d_pad * (2 * in_bytes + 2 * out_bytes + temp_bytes)
    max_rows_vmem = max(8, (vmem_cap // 2) // per_row_vmem)

    tile = max(8, target_block_bytes // (d_pad * in_bytes))
    tile = min(tile, max_rows_vmem, ((rows + 7) // 8) * 8)
    tile = max(8, (tile // 8) * 8)

    min_steps = 4 if is_v7x else 2
    steps = pl.cdiv(rows, tile)
    while tile > 8 and steps < min_steps:
        tile = max(8, ((tile // 2) // 8) * 8)
        steps = pl.cdiv(rows, tile)

    if is_v7x and steps > 1 and steps % 2 == 1:
        # Prefer an even block count so both TensorCores stay busy on the tail.
        cand = max(8, ((pl.cdiv(rows, steps + 1) + 7) // 8) * 8)
        if pl.cdiv(rows, cand) % 2 == 0:
            tile = cand
    return tile


def _input_block_spec(tile_rows, d_pad, deep_buffer):
    index_map = lambda i: (i, 0)
    if deep_buffer:
        try:
            return pl.BlockSpec((tile_rows, d_pad), index_map,
                                pipeline_mode=pl.Buffered(3))
        except TypeError:
            pass  # older BlockSpec without pipeline_mode: fall back to default
    return pl.BlockSpec((tile_rows, d_pad), index_map)


def layer_norm(x, gamma, beta, *, eps=1e-12, tile_rows=None):
    """LayerNorm over the last dimension of x.

    x: (..., d_model); gamma, beta: (d_model,)
    Matches the PyTorch module: mean/var(unbiased=False) over dim=-1,
    gamma * xhat + beta, default eps=1e-12.
    """
    orig_shape = x.shape
    d_model = orig_shape[-1]
    x2 = x.reshape(-1, d_model)
    rows = x2.shape[0]

    # Lane-dense layout: pad d_model up to a multiple of 128 so stores are
    # full unmasked vst; the kernel masks the variance reduction.
    d_pad = ((d_model + 127) // 128) * 128
    if d_pad != d_model:
        x2 = jnp.pad(x2, ((0, 0), (0, d_pad - d_model)))
        gamma_p = jnp.pad(gamma.reshape(-1), (0, d_pad - d_model))
        beta_p = jnp.pad(beta.reshape(-1), (0, d_pad - d_model))
    else:
        gamma_p, beta_p = gamma.reshape(-1), beta.reshape(-1)

    # Cast params to f32 once here (not per grid step inside the kernel).
    gamma2 = gamma_p.reshape(1, d_pad).astype(jnp.float32)
    beta2 = beta_p.reshape(1, d_pad).astype(jnp.float32)

    in_bytes = x.dtype.itemsize
    out_bytes = x.dtype.itemsize
    vmem_cap = _vmem_capacity_bytes()
    if tile_rows is None:
        tile_rows = _choose_tile_rows(rows, d_pad, in_bytes, out_bytes, vmem_cap)
    num_steps = pl.cdiv(rows, tile_rows)

    # Deeper input buffering only pays off for small blocks with enough steps.
    block_in_bytes = tile_rows * d_pad * in_bytes
    deep_buffer = (block_in_bytes < (1 << 20)) and (num_steps >= 3)

    # Scoped-VMEM limit sized from what the tiles actually need (+ headroom),
    # capped well below physical capacity so surrounding fusions have room.
    temp_bytes = 12 if in_bytes < 4 else 8
    n_buf_in = 3 if deep_buffer else 2
    needed = tile_rows * d_pad * (n_buf_in * in_bytes + 2 * out_bytes + temp_bytes)
    needed += 2 * d_pad * 4  # gamma/beta
    vmem_limit = int(min(vmem_cap * 3 // 4, max(2 * needed, 32 << 20)))

    out = pl.pallas_call(
        functools.partial(_layernorm_kernel, eps=eps, d_true=d_model),
        out_shape=jax.ShapeDtypeStruct((rows, d_pad), x.dtype),
        grid_spec=pltpu.PrefetchScalarGridSpec(
            num_scalar_prefetch=0,
            grid=(num_steps,),
            in_specs=[
                _input_block_spec(tile_rows, d_pad, deep_buffer),
                pl.BlockSpec((1, d_pad), lambda i: (0, 0)),
                pl.BlockSpec((1, d_pad), lambda i: (0, 0)),
            ],
            out_specs=pl.BlockSpec((tile_rows, d_pad), lambda i: (i, 0)),
        ),
        compiler_params=pltpu.CompilerParams(
            dimension_semantics=("parallel",),
            vmem_limit_bytes=vmem_limit,
        ),
    )(x2, gamma2, beta2)

    if d_pad != d_model:
        out = out[:, :d_model]
    return out.reshape(orig_shape)


def _ref_layer_norm(x, gamma, beta, eps):
    xf = x.astype(jnp.float32)
    mean = jnp.mean(xf, axis=-1, keepdims=True)
    var = jnp.mean((xf - mean) ** 2, axis=-1, keepdims=True)
    out = gamma * (xf - mean) / jnp.sqrt(var + eps) + beta
    return out.astype(x.dtype)


if __name__ == "__main__":
    key = jax.random.PRNGKey(0)
    eps = 1e-12  # module default (note: differs from torch.nn.LayerNorm's 1e-5)

    # Case 1: lane-dense d_model (multiple of 128), typical transformer layout.
    batch, seq, d_model = 2, 8, 128
    x = jax.random.normal(key, (batch, seq, d_model), dtype=jnp.float32)
    gamma = jnp.ones((d_model,), dtype=jnp.float32)   # nn.Parameter(ones)
    beta = jnp.zeros((d_model,), dtype=jnp.float32)   # nn.Parameter(zeros)
    out = jax.block_until_ready(layer_norm(x, gamma, beta, eps=eps))
    ref = _ref_layer_norm(x, gamma, beta, eps)
    assert out.shape == x.shape and out.dtype == x.dtype
    assert jnp.max(jnp.abs(out - ref)) < 1e-5

    # Case 2: rows not a multiple of the tile -> exercises the cdiv-grid
    # partial last block (no wrapper row-pad copy).
    x2 = jax.random.normal(jax.random.PRNGKey(1), (3, 5, d_model), dtype=jnp.float32)
    out2 = jax.block_until_ready(layer_norm(x2, gamma, beta, eps=eps))
    ref2 = _ref_layer_norm(x2, gamma, beta, eps)
    assert jnp.max(jnp.abs(out2 - ref2)) < 1e-5

    # Case 3: small hidden (d_model=32) -> lane-padded to 128 in the wrapper,
    # masked variance reduction in the kernel, full unmasked stores.
    d_small = 32
    x3 = jax.random.normal(jax.random.PRNGKey(2), (2, 8, d_small), dtype=jnp.float32)
    g3 = jnp.ones((d_small,), dtype=jnp.float32)
    b3 = jnp.zeros((d_small,), dtype=jnp.float32)
    out3 = jax.block_until_ready(layer_norm(x3, g3, b3, eps=eps))
    ref3 = _ref_layer_norm(x3, g3, b3, eps)
    assert jnp.max(jnp.abs(out3 - ref3)) < 1e-5

    # Case 4: bf16 input (dtype-aware VMEM accounting; f32 accumulation inside).
    d4 = 256
    x4 = jax.random.normal(jax.random.PRNGKey(3), (2, 8, d4), dtype=jnp.bfloat16)
    g4 = jnp.ones((d4,), dtype=jnp.bfloat16)
    b4 = jnp.zeros((d4,), dtype=jnp.bfloat16)
    out4 = jax.block_until_ready(layer_norm(x4, g4, b4, eps=eps))
    ref4 = _ref_layer_norm(x4, g4, b4, eps)
    assert out4.dtype == jnp.bfloat16
    assert jnp.max(jnp.abs(out4.astype(jnp.float32) - ref4.astype(jnp.float32))) < 3e-2

    print("KERNEL_OK")
</pallas_src>

<mosaic_0001>
module attributes {stable_mosaic.version = 11 : i64} {
  func.func @_layernorm_kernel(%arg0: i32, %arg1: memref<8x128xf32, #tpu.memory_space<vmem>>, %arg2: memref<1x128xf32, #tpu.memory_space<vmem>>, %arg3: memref<1x128xf32, #tpu.memory_space<vmem>>, %arg4: memref<8x128xf32, #tpu.memory_space<vmem>>) attributes {dimension_semantics = [#tpu.dimension_semantics<parallel>], iteration_bounds = array<i64: 2>, scalar_prefetch = 0 : i64, scratch_operands = 0 : i64, tpu.core_type = #tpu.core_type<tc>, window_params = [{transform_indices = @transform_0, window_bounds = array<i64: 8, 128>}, {pipeline_mode = #tpu.pipeline_mode<synchronous>, transform_indices = @transform_1, window_bounds = array<i64: 1, 128>}, {pipeline_mode = #tpu.pipeline_mode<synchronous>, transform_indices = @transform_2, window_bounds = array<i64: 1, 128>}, {transform_indices = @transform_3, window_bounds = array<i64: 8, 128>}]} {
    %c0 = arith.constant 0 : index
    %c0_0 = arith.constant 0 : index
    %0 = vector.load %arg1[%c0, %c0_0] : memref<8x128xf32, #tpu.memory_space<vmem>>, vector<8x128xf32>
    %cst = arith.constant dense<0.000000e+00> : vector<8xf32>
    %1 = vector.multi_reduction <add>, %0, %cst [1] : vector<8x128xf32> to vector<8xf32>
    %2 = vector.shape_cast %1 : vector<8xf32> to vector<8x1xf32>
    %cst_1 = arith.constant 7.812500e-03 : f32
    %3 = vector.broadcast %cst_1 : f32 to vector<8x1xf32>
    %4 = arith.mulf %2, %3 : vector<8x1xf32>
    %5 = vector.broadcast %4 : vector<8x1xf32> to vector<8x128xf32>
    %6 = arith.subf %0, %5 : vector<8x128xf32>
    %7 = arith.mulf %6, %6 : vector<8x128xf32>
    %cst_2 = arith.constant dense<0.000000e+00> : vector<8xf32>
    %8 = vector.multi_reduction <add>, %7, %cst_2 [1] : vector<8x128xf32> to vector<8xf32>
    %9 = vector.shape_cast %8 : vector<8xf32> to vector<8x1xf32>
    %cst_3 = arith.constant 7.812500e-03 : f32
    %10 = vector.broadcast %cst_3 : f32 to vector<8x1xf32>
    %11 = arith.mulf %9, %10 : vector<8x1xf32>
    %cst_4 = arith.constant 9.99999996E-13 : f32
    %12 = vector.broadcast %cst_4 : f32 to vector<8x1xf32>
    %13 = arith.addf %11, %12 : vector<8x1xf32>
    %14 = math.rsqrt %13 : vector<8x1xf32>
    %15 = vector.broadcast %14 : vector<8x1xf32> to vector<8x128xf32>
    %16 = arith.mulf %6, %15 : vector<8x128xf32>
    %c0_5 = arith.constant 0 : index
    %c0_6 = arith.constant 0 : index
    %17 = vector.load %arg2[%c0_5, %c0_6] : memref<1x128xf32, #tpu.memory_space<vmem>>, vector<1x128xf32>
    %18 = vector.broadcast %17 : vector<1x128xf32> to vector<8x128xf32>
    %19 = arith.mulf %16, %18 : vector<8x128xf32>
    %c0_7 = arith.constant 0 : index
    %c0_8 = arith.constant 0 : index
    %20 = vector.load %arg3[%c0_7, %c0_8] : memref<1x128xf32, #tpu.memory_space<vmem>>, vector<1x128xf32>
    %21 = vector.broadcast %20 : vector<1x128xf32> to vector<8x128xf32>
    %22 = arith.addf %19, %21 : vector<8x128xf32>
    %c0_9 = arith.constant 0 : index
    %c0_10 = arith.constant 0 : index
    %23 = vector.load %arg4[%c0_9, %c0_10] : memref<8x128xf32, #tpu.memory_space<vmem>>, vector<8x128xf32>
    tpu.vector_store %arg4[%c0_9, %c0_10], %22 {strides = array<i32>} : memref<8x128xf32, #tpu.memory_space<vmem>>, vector<8x128xf32>,
    return
  }
  func.func @transform_0(%arg0: i32) -> (i32, i32) {
    %c0_i32 = arith.constant 0 : i32
    %c0_i32_0 = arith.constant 0 : i32
    return %arg0, %c0_i32 : i32, i32
  }
  func.func @transform_1(%arg0: i32) -> (i32, i32) {
    %c0_i32 = arith.constant 0 : i32
    %c0_i32_0 = arith.constant 0 : i32
    %c0_i32_1 = arith.constant 0 : i32
    return %c0_i32, %c0_i32_0 : i32, i32
  }
  func.func @transform_2(%arg0: i32) -> (i32, i32) {
    %c0_i32 = arith.constant 0 : i32
    %c0_i32_0 = arith.constant 0 : i32
    %c0_i32_1 = arith.constant 0 : i32
    return %c0_i32, %c0_i32_0 : i32, i32
  }
  func.func @transform_3(%arg0: i32) -> (i32, i32) {
    %c0_i32 = arith.constant 0 : i32
    %c0_i32_0 = arith.constant 0 : i32
    return %arg0, %c0_i32 : i32, i32
  }
}

</mosaic_0001>

<llo_original>
// kernel: tpu_custom_call.1
$region0: #{tpu_custom_call.1}
  #allocation0 [shape = 'u32[]', space=smem, size = 0x4, offset = 0x4, fixed_abs, tag = 'smem constant byte address 0x4 - core index']
  #allocation1 [shape = 'u32[144,128]{1,0:T(1,128)}', space=vmem, size = 0x12000, scoped, tag = 'internal scratch']
  %s0 = inlined_call_operand.hbm [shape: f32[16,128], index: 0, kind: input, shape index: {}]
  %s1 = inlined_call_operand.vmem [shape: f32[1,128], index: 1, kind: input, shape index: {}]
  %s2 = inlined_call_operand.vmem [shape: f32[1,128], index: 2, kind: input, shape index: {}]
  %s3 = inlined_call_operand.hbm [shape: f32[16,128], index: 3, kind: output, shape index: {}]
  %s4 = sld [smem:[#allocation0]]
  $region49: #{tpu_custom_call.1} parent=0
    _
  %s6 = ssub.s32 1, %s4
  %s7 = scalar_select 0, %s6, %s4
  $region1: #{tpu_custom_call.1} parent=0
    #allocation2 [shape = 'u8[8192]{0}', space=vmem, size = 0x2000, scoped, tag = 'input window, operand 0']
    #allocation3 [shape = 's32[2]{0}', space=sflag, size = 0x8, scoped, tag = 'scoped memory for tpu_custom_call.1']
    #allocation4 [shape = 's32[2]{0}', space=sflag, size = 0x8, scoped, tag = 'scoped memory for tpu_custom_call.1']
    #allocation5 [shape = 'u8[8192]{0}', space=vmem, size = 0x2000, scoped, tag = 'output window, operand 0']
    %8 = vsyncpa [#allocation3], 0
    %s9 = scalar_lea.sflag [#allocation3], 1
    %10 = vsyncpa %s9, 0
    %11 = vsyncpa [#allocation4], 0
    %s12 = scalar_lea.sflag [#allocation4], 1
    %13 = vsyncpa %s12, 0
    loop: start=0, step=1, limit=4
    $region2: #{tpu_custom_call.1} parent=1 // loop_pre_header
      _
    $region3: #{tpu_custom_call.1} parent=1 // loop_header
      %s15 = sphi 0, %s19
      %p16 = scmp.ge.s32.totalorder %s15, 4
      %s25 = sphi 0, %s27
      %s28 = sphi 0, %s25
      %s29 = sphi 0, %s28
      %s45 = sphi 0, %s29
      %s49 = sphi 0, %s49
      %s51 = sphi 0, %s49
      %s52 = sphi 0, %s51
      %s66 = sphi 0, %s52
      %s70 = sphi 0, %s70
      %s72 = sphi 0, %s70
      %s73 = sphi 0, %s72
      %s87 = sphi 0, %s73
      %s93 = sphi 0, %s95
      %s96 = sphi 0, %s93
      %s97 = sphi 0, %s96
      %s113 = sphi 0, %s97
    $region4: #{tpu_custom_call.1} parent=1 // loop_header_branch
      %18 = sbr.rel (%p16) target = $region8
    $region5: #{tpu_custom_call.1} parent=1 // loop_body
      %s20 = ssub.s32 %s15, 1
      %s21 = ssub.s32 %s15, 2
      %s22 = sadd.s32 %s15, 1
      %s23 = ssub.s32 %s15, %s22
      %p24 = scmp.eq.s32.totalorder %s23, 0
      %s26 = sadd.s32 %s25, 1
      %s27 = scalar_select %p24, %s25, %s26
      %p30 = pneg %p24
      %p31 = scmp.eq.s32.totalorder %s15, 1
      %p32 = por %p30, %p31
      %p33 = scmp.ne.s32.totalorder %s25, %s28
      %p34 = scmp.eq.s32.totalorder %s15, 0
      %p35 = por %p33, %p34
      %p36 = scmp.ne.s32.totalorder %s25, %s28
      %p37 = scmp.eq.s32.totalorder %s20, 1
      %p38 = por %p36, %p37
      %p39 = scmp.ne.s32.totalorder %s28, %s29
      %p40 = scmp.eq.s32.totalorder %s20, 0
      %p41 = por %p39, %p40
      %p42 = scmp.ne.s32.totalorder %s28, %s29
      %p43 = scmp.eq.s32.totalorder %s21, 1
      %p44 = por %p42, %p43
      %p46 = scmp.ne.s32.totalorder %s29, %s45
      %p47 = scmp.eq.s32.totalorder %s21, 0
      %p48 = por %p46, %p47
      %s50 = sadd.s32 %s49, 1
      %p53 = scmp.eq.s32.totalorder %s15, 1
      %p54 = scmp.ne.s32.totalorder %s49, %s51
      %p55 = scmp.eq.s32.totalorder %s15, 0
      %p56 = por %p54, %p55
      %p57 = scmp.ne.s32.totalorder %s49, %s51
      %p58 = scmp.eq.s32.totalorder %s20, 1
      %p59 = por %p57, %p58
      %p60 = scmp.ne.s32.totalorder %s51, %s52
      %p61 = scmp.eq.s32.totalorder %s20, 0
      %p62 = por %p60, %p61
      %p63 = scmp.ne.s32.totalorder %s51, %s52
      %p64 = scmp.eq.s32.totalorder %s21, 1
      %p65 = por %p63, %p64
      %p67 = scmp.ne.s32.totalorder %s52, %s66
      %p68 = scmp.eq.s32.totalorder %s21, 0
      %p69 = por %p67, %p68
      %s71 = sadd.s32 %s70, 1
      %p74 = scmp.eq.s32.totalorder %s15, 1
      %p75 = scmp.ne.s32.totalorder %s70, %s72
      %p76 = scmp.eq.s32.totalorder %s15, 0
      %p77 = por %p75, %p76
      %p78 = scmp.ne.s32.totalorder %s70, %s72
      %p79 = scmp.eq.s32.totalorder %s20, 1
      %p80 = por %p78, %p79
      %p81 = scmp.ne.s32.totalorder %s72, %s73
      %p82 = scmp.eq.s32.totalorder %s20, 0
      %p83 = por %p81, %p82
      %p84 = scmp.ne.s32.totalorder %s72, %s73
      %p85 = scmp.eq.s32.totalorder %s21, 1
      %p86 = por %p84, %p85
      %p88 = scmp.ne.s32.totalorder %s73, %s87
      %p89 = scmp.eq.s32.totalorder %s21, 0
      %p90 = por %p88, %p89
      %s91 = ssub.s32 %s15, %s22
      %p92 = scmp.eq.s32.totalorder %s91, 0
      %s94 = sadd.s32 %s93, 1
      %s95 = scalar_select %p92, %s93, %s94
      %p98 = pneg %p92
      %p99 = scmp.eq.s32.totalorder %s15, 1
      %p100 = por %p98, %p99
      %p101 = scmp.ne.s32.totalorder %s93, %s96
      %p102 = scmp.eq.s32.totalorder %s15, 0
      %p103 = por %p101, %p102
      %p104 = scmp.ne.s32.totalorder %s93, %s96
      %p105 = scmp.eq.s32.totalorder %s20, 1
      %p106 = por %p104, %p105
      %p107 = scmp.ne.s32.totalorder %s96, %s97
      %p108 = scmp.eq.s32.totalorder %s20, 0
      %p109 = por %p107, %p108
      %p110 = scmp.ne.s32.totalorder %s96, %s97
      %p111 = scmp.eq.s32.totalorder %s21, 1
      %p112 = por %p110, %p111
      %p114 = scmp.ne.s32.totalorder %s97, %s113
      %p115 = scmp.eq.s32.totalorder %s21, 0
      %p116 = por %p114, %p115
      %p117 = scmp.le.s32.totalorder 1, %s15
      %p118 = scmp.lt.s32.totalorder %s15, 3
      %p119 = pnand %p117, %p118
      %p120 = pneg %p119
      // Predicated region
      $region9: #{tpu_custom_call.1} parent=5 // pred_check
        _
      $region10: #{tpu_custom_call.1} parent=5 // pred_check_branch
        %122 = sbr.rel (%p119) target = $region12
      $region11: #{tpu_custom_call.1} parent=5 // pred_region
        %s123 = ssub.s32 %s15, 1
        // Predicated region
        $region13: #{tpu_custom_call.1} parent=11 // pred_check
          %p124 = pneg %p62
        $region14: #{tpu_custom_call.1} parent=11 // pred_check_branch
          %126 = sbr.rel (%p124) target = $region16
        $region15: #{tpu_custom_call.1} parent=11 // pred_region
          _
        $region16: #{tpu_custom_call.1} parent=11 // pred_fallthru
          _
        // Predicated region
        $region17: #{tpu_custom_call.1} parent=11 // pred_check
          %p127 = pneg %p83
        $region18: #{tpu_custom_call.1} parent=11 // pred_check_branch
          %129 = sbr.rel (%p127) target = $region20
        $region19: #{tpu_custom_call.1} parent=11 // pred_region
          _
        $region20: #{tpu_custom_call.1} parent=11 // pred_fallthru
          _
      $region12: #{tpu_custom_call.1} parent=5 // pred_fallthru
        _
      %p130 = scmp.lt.s32.totalorder %s15, 2
      // Predicated region
      $region21: #{tpu_custom_call.1} parent=5 // pred_check
        %p131 = pneg %p130
      $region22: #{tpu_custom_call.1} parent=5 // pred_check_branch
        %133 = sbr.rel (%p131) target = $region24
      $region23: #{tpu_custom_call.1} parent=5 // pred_region
        // Predicated region
        $region25: #{tpu_custom_call.1} parent=23 // pred_check
          %p134 = pneg %p35
        $region26: #{tpu_custom_call.1} parent=23 // pred_check_branch
          %136 = sbr.rel (%p134) target = $region28
        $region27: #{tpu_custom_call.1} parent=23 // pred_region
          %s137 = sand.u32 %s25, 1
          %s138 = scalar_lea.sflag [#allocation3], %s137
          %s139 = sand.u32 %s25, 1
          %s140 = smul.addr %s139, 8
          %s141 = scalar_lea.vmem [#allocation2], %s140
          %s143 = ssub.s32 128, 128
          %144 = vsyncadd %s138, %s143
          %s145 = smul.addr %s15, 128
          %s146 = scalar_lea.hbm %s0, %s145
          %s148 = sshll.u32 %s141, 4
          %s149 = int_to_ptr.vmem [resolvable:$true] %s148
          %151 = dma.hbm_to_vmem [thread:$0]  %s146, 128, %s149, %s138
        $region28: #{tpu_custom_call.1} parent=23 // pred_fallthru
          _
      $region24: #{tpu_custom_call.1} parent=5 // pred_fallthru
        _
      %p152 = scmp.le.s32.totalorder 1, %s15
      %p153 = scmp.lt.s32.totalorder %s15, 3
      %p154 = pnand %p152, %p153
      %p155 = pneg %p154
      // Predicated region
      $region29: #{tpu_custom_call.1} parent=5 // pred_check
        _
      $region30: #{tpu_custom_call.1} parent=5 // pred_check_branch
        %157 = sbr.rel (%p154) target = $region32
      $region31: #{tpu_custom_call.1} parent=5 // pred_region
        %s158 = ssub.s32 %s15, 1
        %s159 = sand.u32 %s28, 1
        %s160 = scalar_lea.sflag [#allocation3], %s159
        %s161 = sand.u32 %s28, 1
        %s162 = smul.addr %s161, 8
        %s163 = scalar_lea.vmem [#allocation2], %s162
        // Predicated region
        $region33: #{tpu_custom_call.1} parent=31 // pred_check
          %p164 = pneg %p41
        $region34: #{tpu_custom_call.1} parent=31 // pred_check_branch
          %166 = sbr.rel (%p164) target = $region36
        $region35: #{tpu_custom_call.1} parent=31 // pred_region
          %167 = dma.done %s160, 128
        $region36: #{tpu_custom_call.1} parent=31 // pred_fallthru
          _
        %s168 = sand.u32 %s28, 1
        %s169 = scalar_lea.sflag [#allocation3], %s168
        %s170 = sand.u32 %s28, 1
        %s171 = smul.addr %s170, 8
        %s172 = scalar_lea.vmem [#allocation2], %s171
        %p173 = pneg %p41
        %p174 = pneg %p38
        %p175 = pneg %p62
        %p176 = pneg %p59
        %p177 = pneg %p83
        %p178 = pneg %p80
        %p179 = pneg %p109
        %p180 = pneg %p106
        %s181 = sand.u32 %s96, 1
        %s182 = scalar_lea.sflag [#allocation4], %s181
        %s183 = sand.u32 %s96, 1
        %s184 = smul.addr %s183, 8
        %s185 = scalar_lea.vmem [#allocation5], %s184
        %v186 = vld [vmem:[%s163] sm:$0xff]
        %187 = vadd.xlane.f32.xlu0 %v186
        %v188 = vpop.xlane.xlu0 %187
        %v189 = vmul.f32 %v188, 0.0078125
        %v190 = vsub.f32 %v186, %v189
        %v191 = vmul.f32 %v190, %v190
        %192 = vadd.xlane.f32.xlu0 %v191
        %v193 = vpop.xlane.xlu0 %192
        %v194 = vmul.f32 %v193, 0.0078125
        %v195 = vadd.f32 %v194, 1e-12
        %v196 = vrsqrt.pop %v195
        %v197 = vmul.f32 %v190, %v196
        %v198 = vld [vmem:[%s1] sm:$0x1]
        %v200 = vlaneseq
        %v201 = vshrl.u32 %v200, 7
        %v202 = vsub.s32 0, %v201
        %v203 = vrot.slane %v198, %v202
        %v205 = vmul.f32 %v197, %v203
        %v206 = vld [vmem:[%s2] sm:$0x1]
        %v208 = vlaneseq
        %v209 = vshrl.u32 %v208, 7
        %v210 = vsub.s32 0, %v209
        %v211 = vrot.slane %v206, %v210
        %v213 = vadd.f32 %v205, %v211
        %214 = vst [vmem:[%s185] sm:$0xff] %v213
        %s215 = sand.u32 %s96, 1
        %s216 = scalar_lea.sflag [#allocation4], %s215
        %s217 = sand.u32 %s96, 1
        %s218 = smul.addr %s217, 8
        %s219 = scalar_lea.vmem [#allocation5], %s218
        // Predicated region
        $region37: #{tpu_custom_call.1} parent=31 // pred_check
          %p220 = pneg %p106
        $region38: #{tpu_custom_call.1} parent=31 // pred_check_branch
          %222 = sbr.rel (%p220) target = $region40
        $region39: #{tpu_custom_call.1} parent=31 // pred_region
          %s224 = ssub.s32 128, 128
          %225 = vsyncadd %s216, %s224
          %s226 = smul.addr %s20, 128
          %s227 = scalar_lea.hbm %s3, %s226
          %s229 = sshll.u32 %s219, 4
          %s230 = int_to_ptr.vmem [resolvable:$true] %s229
          %232 = dma.vmem_to_hbm [thread:$0]  %s230, 128, %s227, %s216
        $region40: #{tpu_custom_call.1} parent=31 // pred_fallthru
          _
      $region32: #{tpu_custom_call.1} parent=5 // pred_fallthru
        _
      %p233 = scmp.le.s32.totalorder 2, %s15
      // Predicated region
      $region41: #{tpu_custom_call.1} parent=5 // pred_check
        %p234 = pneg %p233
      $region42: #{tpu_custom_call.1} parent=5 // pred_check_branch
        %236 = sbr.rel (%p234) target = $region44
      $region43: #{tpu_custom_call.1} parent=5 // pred_region
        %s237 = ssub.s32 %s15, 2
        // Predicated region
        $region45: #{tpu_custom_call.1} parent=43 // pred_check
          %p238 = pneg %p112
        $region46: #{tpu_custom_call.1} parent=43 // pred_check_branch
          %240 = sbr.rel (%p238) target = $region48
        $region47: #{tpu_custom_call.1} parent=43 // pred_region
          %s241 = sand.u32 %s97, 1
          %s242 = scalar_lea.sflag [#allocation4], %s241
          %s243 = sand.u32 %s97, 1
          %s244 = smul.addr %s243, 8
          %s245 = scalar_lea.vmem [#allocation5], %s244
          %246 = dma.done %s242, 128
        $region48: #{tpu_custom_call.1} parent=43 // pred_fallthru
          _
      $region44: #{tpu_custom_call.1} parent=5 // pred_fallthru
        _
    $region6: #{tpu_custom_call.1} parent=1 // loop_footer
      %s19 = sadd.s32 1, %s15
    $region7: #{tpu_custom_call.1} parent=1 // loop_footer_branch
      %14 = sbr.rel target = $region3
    $region8: #{tpu_custom_call.1} parent=1 // loop_exit
      _
    %247 = vsyncpa [#allocation3], 1
    %s248 = scalar_lea.sflag [#allocation3], 1
    %249 = vsyncpa %s248, 1
    %250 = vsyncpa [#allocation4], 1
    %s251 = scalar_lea.sflag [#allocation4], 1
    %252 = vsyncpa %s251, 1

</llo_original>
